<compile_context>
chip_gen: v5e
topology: v5e:2x2
jax: 0.10.0
libtpu: 0.0.40
codegen_flags: <defaults>
</compile_context>

<pallas_src>
import functools

import jax
import jax.numpy as jnp
from jax.experimental import pallas as pl
from jax.experimental.pallas import tpu as pltpu

EPS = 1e-5


def _round_up(x, m):
    return (x + m - 1) // m * m


def _cdiv(a, b):
    return -(-a // b)


def _vmem_capacity_bytes():
    """Physical per-TensorCore VMEM; conservative fallback (v7x) if unavailable."""
    try:
        info = pltpu.get_tpu_info()
        cap = int(getattr(info, "vmem_capacity_bytes", 0) or 0)
        if cap > 0:
            return cap
    except Exception:
        pass
    return 64 << 20


def _select_tiling(hw, cin, cout, in_isz, out_isz, hw_tile):
    """Pick the spatial (lane) tile, number of tiles, and the VMEM-limit ceiling."""
    cap = _vmem_capacity_bytes()
    ceiling = (cap * 4) // 5            # vmem_limit_bytes ceiling (~51 MiB v7x, ~102 MiB v5e/v6e)
    work = (cap * 7) // 10              # budget for double-buffered streamed blocks
    if hw_tile is None:
        hw_tile = 8192 if cap >= (96 << 20) else 2048

    # Per-lane-column bytes of the worst pass (pass 2): 2 x-bufs + 2 out-bufs + f32 temps.
    per_col = 2 * cin * in_isz + 2 * cout * out_isz + 4 * (cin + cout)
    fixed = 2 * cout * cin * max(in_isz, 4) + (2 << 20)     # folded weight + slack
    tile_cap = (work - fixed) // per_col
    tile_cap = max(128, min(tile_cap, _round_up(hw_tile, 128)))
    tile_cap = (tile_cap // 128) * 128

    if hw <= tile_cap:
        # Single full-extent block (allowed even when HW is not a multiple of 128);
        # no padding, no masking needed.
        return hw, 1, ceiling

    n_tiles = _cdiv(hw, tile_cap)
    tile = min(tile_cap, _round_up(_cdiv(hw, n_tiles), 128))   # even out tiles -> minimal waste
    n_tiles = _cdiv(hw, tile)
    return tile, n_tiles, ceiling


def _stats_kernel(x_ref, g_ref, s_ref, *, hw, tile, tiles_per_chunk, need_mask,
                  lane_chunks):
    # x_ref: (Cin, tile).  g_ref: (Cin, Cin) and s_ref: (Cin, 128|1) are resident
    # output accumulators across the (arbitrary) tile axis.
    c = pl.program_id(1)
    t = pl.program_id(2)

    @pl.when(t == 0)
    def _():
        g_ref[...] = jnp.zeros_like(g_ref)
        s_ref[...] = jnp.zeros_like(s_ref)

    x = x_ref[...]
    if need_mask:
        # Ragged last tile / phantom tiles: zero columns past the true HW extent.
        start = (c * tiles_per_chunk + t) * tile
        col = jax.lax.broadcasted_iota(jnp.int32, x.shape, 1)
        x = jnp.where(col < (hw - start), x, jnp.zeros_like(x))

    # Gram accumulation on the MXU: G += x @ x.T (contract the lane/HW axis).
    g_ref[...] += jax.lax.dot_general(
        x, x, (((1,), (1,)), ((), ())), preferred_element_type=jnp.float32)

    # Column-sum accumulation.  Lane-parallel VPU adds (no per-tile XLU reduce);
    # the single cross-lane reduction happens once in the wrapper.
    if lane_chunks:
        for j in range(lane_chunks):
            s_ref[...] += x[:, j * 128:(j + 1) * 128].astype(jnp.float32)
    else:
        # Single small full-extent tile: one cross-lane reduce total is fine.
        s_ref[...] += jnp.sum(x.astype(jnp.float32), axis=-1, keepdims=True)


def _normalize_kernel(x_ref, w_ref, beta_ref, o_ref):
    # o = (W * rstd) @ x + (-mean * rstd); mean/rstd were folded into w/beta.
    y = jnp.dot(w_ref[...], x_ref[...], preferred_element_type=jnp.float32)
    o_ref[...] = (y + beta_ref[...]).astype(o_ref.dtype)


def conv_bn(x_nchw, weight, bias=None, *, hw_tile=None):
    """1x1 Conv2d followed by InstanceNorm2d(affine=False, eps=1e-5).

    x_nchw: (N, Cin, H, W); weight: (Cout, Cin); bias: (Cout,) or None.
    The conv bias is a mathematical no-op after instance normalization.
    """
    del bias  # cancelled exactly by the per-channel spatial mean subtraction

    N, Cin, H, W = x_nchw.shape
    Cout = weight.shape[0]
    HW = H * W

    in_isz = x_nchw.dtype.itemsize
    out_isz = in_isz
    tile, n_tiles, vmem_ceiling = _select_tiling(HW, Cin, Cout, in_isz, out_isz, hw_tile)

    x_flat = x_nchw.reshape(N, Cin, HW)   # collapse reshape: no data movement

    # ---- Pass 1: streaming Gram / column-sum statistics ----------------------
    # Extra parallel HW-chunk axis gives v7x's 2 TensorCores work when N == 1.
    n_chunks = 2 if (N == 1 and n_tiles >= 2) else 1
    tiles_per_chunk = _cdiv(n_tiles, n_chunks)
    need_mask = n_chunks * tiles_per_chunk * tile > HW
    lane_chunks = tile // 128 if tile % 128 == 0 else 0
    sw = 128 if lane_chunks else 1

    if n_chunks * tiles_per_chunk > n_tiles:
        def x1_map(n, c, t):   # clamp phantom tiles to a valid block; mask zeroes them
            return (n, 0, jnp.minimum(c * tiles_per_chunk + t, n_tiles - 1))
    else:
        def x1_map(n, c, t):
            return (n, 0, c * tiles_per_chunk + t)

    x_blk = Cin * tile * in_isz
    g_blk = Cin * Cin * 4
    s_blk = Cin * sw * 4
    vmem1 = min(max(2 * (x_blk + g_blk + s_blk) + (4 << 20), 32 << 20), vmem_ceiling)

    g_part, s_part = pl.pallas_call(
        functools.partial(_stats_kernel, hw=HW, tile=tile,
                          tiles_per_chunk=tiles_per_chunk,
                          need_mask=need_mask, lane_chunks=lane_chunks),
        out_shape=(jax.ShapeDtypeStruct((N, n_chunks, Cin, Cin), jnp.float32),
                   jax.ShapeDtypeStruct((N, n_chunks, Cin, sw), jnp.float32)),
        grid_spec=pltpu.PrefetchScalarGridSpec(
            num_scalar_prefetch=0,
            grid=(N, n_chunks, tiles_per_chunk),
            in_specs=[pl.BlockSpec((pl.Squeezed(), Cin, tile), x1_map)],
            out_specs=[
                pl.BlockSpec((pl.Squeezed(), pl.Squeezed(), Cin, Cin),
                             lambda n, c, t: (n, c, 0, 0)),
                pl.BlockSpec((pl.Squeezed(), pl.Squeezed(), Cin, sw),
                             lambda n, c, t: (n, c, 0, 0)),
            ],
        ),
        compiler_params=pltpu.CompilerParams(
            dimension_semantics=("parallel", "parallel", "arbitrary"),
            vmem_limit_bytes=vmem1,
        ),
    )(x_flat)

    # ---- Finalize stats & fold normalization into weight/bias (tiny XLA ops) --
    g = jnp.sum(g_part, axis=1)                 # (N, Cin, Cin)
    s = jnp.sum(s_part, axis=(1, 3))            # (N, Cin)
    w32 = weight.astype(jnp.float32)
    inv_hw = jnp.float32(1.0 / HW)
    mean = jnp.einsum("nc,oc->no", s, w32) * inv_hw            # (N, Cout)
    ey2 = jnp.einsum("oc,ncd,od->no", w32, g, w32) * inv_hw    # (N, Cout)
    var = jnp.maximum(ey2 - mean * mean, 0.0)                  # biased variance
    rstd = jax.lax.rsqrt(var + EPS)
    w_fold = (w32[None] * rstd[:, :, None]).astype(x_nchw.dtype)   # (N, Cout, Cin)
    beta = (-mean * rstd)[..., None]                                # (N, Cout, 1) f32

    # ---- Pass 2: o = (W * rstd) @ x + beta, streamed over HW tiles -----------
    o_blk = Cout * tile * out_isz
    w_blk = Cout * Cin * in_isz
    vmem2 = min(max(2 * (x_blk + o_blk + w_blk + Cout * 4) + (4 << 20), 32 << 20),
                vmem_ceiling)

    out_flat = pl.pallas_call(
        _normalize_kernel,
        out_shape=jax.ShapeDtypeStruct((N, Cout, HW), x_nchw.dtype),
        grid_spec=pltpu.PrefetchScalarGridSpec(
            num_scalar_prefetch=0,
            grid=(N, n_tiles),
            in_specs=[
                pl.BlockSpec((pl.Squeezed(), Cin, tile), lambda n, h: (n, 0, h)),
                pl.BlockSpec((pl.Squeezed(), Cout, Cin), lambda n, h: (n, 0, 0)),
                pl.BlockSpec((pl.Squeezed(), Cout, 1), lambda n, h: (n, 0, 0)),
            ],
            out_specs=pl.BlockSpec((pl.Squeezed(), Cout, tile),
                                   lambda n, h: (n, 0, h)),
        ),
        compiler_params=pltpu.CompilerParams(
            dimension_semantics=("parallel", "parallel"),
            vmem_limit_bytes=vmem2,
        ),
    )(x_flat, w_fold, beta)

    # Split reshape only (no slice): free.
    return out_flat.reshape(N, Cout, H, W)


def _reference(x, weight, bias):
    # Pure-JAX reference: 1x1 conv (with bias) + InstanceNorm2d(affine=False).
    y = jnp.einsum("oc,nchw->nohw", weight, x) + bias[None, :, None, None]
    mean = y.mean(axis=(2, 3), keepdims=True)
    var = ((y - mean) ** 2).mean(axis=(2, 3), keepdims=True)
    return (y - mean) / jnp.sqrt(var + EPS)


if __name__ == "__main__":
    key = jax.random.PRNGKey(0)

    def make_case(k, N, Cin, Cout, H, W):
        kx, kw, kb = jax.random.split(k, 3)
        x = jax.random.normal(kx, (N, Cin, H, W), dtype=jnp.float32)
        bound = 1.0 / jnp.sqrt(jnp.float32(Cin))  # PyTorch Conv2d-style init bound
        w = jax.random.uniform(kw, (Cout, Cin), jnp.float32, -bound, bound)
        b = jax.random.uniform(kb, (Cout,), jnp.float32, -bound, bound)
        return x, w, b

    k1, k2, k3 = jax.random.split(key, 3)

    # Case 1: lane-aligned spatial extent (HW = 256), single tile, N > 1.
    x, w, b = make_case(k1, 2, 4, 8, 16, 16)
    out = jax.block_until_ready(conv_bn(x, w, b))
    ref = _reference(x, w, b)
    assert jnp.allclose(out, ref, atol=1e-4, rtol=1e-4), "case 1 mismatch vs reference"

    # Case 2: tiny ragged spatial extent (HW = 63 -> full-extent non-128 block).
    x, w, b = make_case(k2, 1, 3, 5, 7, 9)
    out = jax.block_until_ready(conv_bn(x, w, b))
    ref = _reference(x, w, b)
    assert jnp.allclose(out, ref, atol=1e-4, rtol=1e-4), "case 2 mismatch vs reference"

    # Case 3: forced multi-tile path (HW = 300, hw_tile=128): ragged last tile
    # masking, N == 1 chunk split across the parallel axis, phantom-tile clamp.
    x, w, b = make_case(k3, 1, 4, 6, 15, 20)
    out = jax.block_until_ready(conv_bn(x, w, b, hw_tile=128))
    ref = _reference(x, w, b)
    assert jnp.allclose(out, ref, atol=1e-4, rtol=1e-4), "case 3 mismatch vs reference"

    print("KERNEL_OK")
</pallas_src>

<mosaic_0001>
module attributes {stable_mosaic.version = 11 : i64} {
  func.func @_stats_kernel(%arg0: i32, %arg1: i32, %arg2: i32, %arg3: memref<1x4x256xf32, #tpu.memory_space<vmem>>, %arg4: memref<1x1x4x4xf32, #tpu.memory_space<vmem>>, %arg5: memref<1x1x4x128xf32, #tpu.memory_space<vmem>>) attributes {dimension_semantics = [#tpu.dimension_semantics<parallel>, #tpu.dimension_semantics<parallel>, #tpu.dimension_semantics<arbitrary>], iteration_bounds = array<i64: 2, 1, 1>, scalar_prefetch = 0 : i64, scratch_operands = 0 : i64, tpu.core_type = #tpu.core_type<tc>, window_params = [{transform_indices = @transform_0, window_bounds = array<i64: 1, 4, 256>}, {transform_indices = @transform_1, window_bounds = array<i64: 1, 1, 4, 4>}, {transform_indices = @transform_2, window_bounds = array<i64: 1, 1, 4, 128>}]} {
    %c0_i32 = arith.constant 0 : i32
    %0 = arith.cmpi eq, %arg2, %c0_i32 : i32
    %1 = arith.extui %0 : i1 to i32
    %c0_i32_0 = arith.constant 0 : i32
    %2 = arith.cmpi ne, %1, %c0_i32_0 : i32
    scf.if %2 {
      %cst_27 = arith.constant 0.000000e+00 : f32
      %26 = vector.broadcast %cst_27 : f32 to vector<4x4xf32>
      %c0_28 = arith.constant 0 : index
      %c0_29 = arith.constant 0 : index
      %c0_30 = arith.constant 0 : index
      %c0_31 = arith.constant 0 : index
      %27 = vector.load %arg4[%c0_28, %c0_29, %c0_30, %c0_31] : memref<1x1x4x4xf32, #tpu.memory_space<vmem>>, vector<1x1x4x4xf32>
      %28 = vector.shape_cast %27 : vector<1x1x4x4xf32> to vector<4x4xf32>
      %29 = vector.shape_cast %26 : vector<4x4xf32> to vector<1x1x4x4xf32>
      tpu.vector_store %arg4[%c0_28, %c0_29, %c0_30, %c0_31], %29 {strides = array<i32>} : memref<1x1x4x4xf32, #tpu.memory_space<vmem>>, vector<1x1x4x4xf32>,
      %cst_32 = arith.constant 0.000000e+00 : f32
      %30 = vector.broadcast %cst_32 : f32 to vector<4x128xf32>
      %c0_33 = arith.constant 0 : index
      %c0_34 = arith.constant 0 : index
      %c0_35 = arith.constant 0 : index
      %c0_36 = arith.constant 0 : index
      %31 = vector.load %arg5[%c0_33, %c0_34, %c0_35, %c0_36] : memref<1x1x4x128xf32, #tpu.memory_space<vmem>>, vector<1x1x4x128xf32>
      %32 = vector.shape_cast %31 : vector<1x1x4x128xf32> to vector<4x128xf32>
      %33 = vector.shape_cast %30 : vector<4x128xf32> to vector<1x1x4x128xf32>
      tpu.vector_store %arg5[%c0_33, %c0_34, %c0_35, %c0_36], %33 {strides = array<i32>} : memref<1x1x4x128xf32, #tpu.memory_space<vmem>>, vector<1x1x4x128xf32>,
    } else {
    }
    %c0 = arith.constant 0 : index
    %c0_1 = arith.constant 0 : index
    %c0_2 = arith.constant 0 : index
    %3 = vector.load %arg3[%c0, %c0_1, %c0_2] : memref<1x4x256xf32, #tpu.memory_space<vmem>>, vector<1x4x256xf32>
    %4 = vector.shape_cast %3 : vector<1x4x256xf32> to vector<4x256xf32>
    %c0_3 = arith.constant 0 : index
    %c0_4 = arith.constant 0 : index
    %c0_5 = arith.constant 0 : index
    %c0_6 = arith.constant 0 : index
    %5 = vector.load %arg4[%c0_3, %c0_4, %c0_5, %c0_6] : memref<1x1x4x4xf32, #tpu.memory_space<vmem>>, vector<1x1x4x4xf32>
    %6 = vector.shape_cast %5 : vector<1x1x4x4xf32> to vector<4x4xf32>
    %cst = arith.constant dense<0.000000e+00> : vector<4x4xf32>
    %7 = tpu.matmul %4, %4, %cst {dimension_numbers = #tpu.dot_dimension_numbers<[1], [1], [0], [0], [0, 0, 1, 0], [], []>} : vector<4x256xf32>, vector<4x256xf32>, vector<4x4xf32> -> vector<4x4xf32>
    %8 = arith.addf %6, %7 : vector<4x4xf32>
    %c0_7 = arith.constant 0 : index
    %c0_8 = arith.constant 0 : index
    %c0_9 = arith.constant 0 : index
    %c0_10 = arith.constant 0 : index
    %9 = vector.load %arg4[%c0_7, %c0_8, %c0_9, %c0_10] : memref<1x1x4x4xf32, #tpu.memory_space<vmem>>, vector<1x1x4x4xf32>
    %10 = vector.shape_cast %9 : vector<1x1x4x4xf32> to vector<4x4xf32>
    %11 = vector.shape_cast %8 : vector<4x4xf32> to vector<1x1x4x4xf32>
    tpu.vector_store %arg4[%c0_7, %c0_8, %c0_9, %c0_10], %11 {strides = array<i32>} : memref<1x1x4x4xf32, #tpu.memory_space<vmem>>, vector<1x1x4x4xf32>,
    %c0_11 = arith.constant 0 : index
    %c0_12 = arith.constant 0 : index
    %c0_13 = arith.constant 0 : index
    %c0_14 = arith.constant 0 : index
    %12 = vector.load %arg5[%c0_11, %c0_12, %c0_13, %c0_14] : memref<1x1x4x128xf32, #tpu.memory_space<vmem>>, vector<1x1x4x128xf32>
    %13 = vector.shape_cast %12 : vector<1x1x4x128xf32> to vector<4x128xf32>
    %14 = vector.extract_strided_slice %4 {offsets = [0, 0], sizes = [4, 128], strides = [1, 1]} : vector<4x256xf32> to vector<4x128xf32>
    %15 = arith.addf %13, %14 : vector<4x128xf32>
    %c0_15 = arith.constant 0 : index
    %c0_16 = arith.constant 0 : index
    %c0_17 = arith.constant 0 : index
    %c0_18 = arith.constant 0 : index
    %16 = vector.load %arg5[%c0_15, %c0_16, %c0_17, %c0_18] : memref<1x1x4x128xf32, #tpu.memory_space<vmem>>, vector<1x1x4x128xf32>
    %17 = vector.shape_cast %16 : vector<1x1x4x128xf32> to vector<4x128xf32>
    %18 = vector.shape_cast %15 : vector<4x128xf32> to vector<1x1x4x128xf32>
    tpu.vector_store %arg5[%c0_15, %c0_16, %c0_17, %c0_18], %18 {strides = array<i32>} : memref<1x1x4x128xf32, #tpu.memory_space<vmem>>, vector<1x1x4x128xf32>,
    %c0_19 = arith.constant 0 : index
    %c0_20 = arith.constant 0 : index
    %c0_21 = arith.constant 0 : index
    %c0_22 = arith.constant 0 : index
    %19 = vector.load %arg5[%c0_19, %c0_20, %c0_21, %c0_22] : memref<1x1x4x128xf32, #tpu.memory_space<vmem>>, vector<1x1x4x128xf32>
    %20 = vector.shape_cast %19 : vector<1x1x4x128xf32> to vector<4x128xf32>
    %21 = vector.extract_strided_slice %4 {offsets = [0, 128], sizes = [4, 128], strides = [1, 1]} : vector<4x256xf32> to vector<4x128xf32>
    %22 = arith.addf %20, %21 : vector<4x128xf32>
    %c0_23 = arith.constant 0 : index
    %c0_24 = arith.constant 0 : index
    %c0_25 = arith.constant 0 : index
    %c0_26 = arith.constant 0 : index
    %23 = vector.load %arg5[%c0_23, %c0_24, %c0_25, %c0_26] : memref<1x1x4x128xf32, #tpu.memory_space<vmem>>, vector<1x1x4x128xf32>
    %24 = vector.shape_cast %23 : vector<1x1x4x128xf32> to vector<4x128xf32>
    %25 = vector.shape_cast %22 : vector<4x128xf32> to vector<1x1x4x128xf32>
    tpu.vector_store %arg5[%c0_23, %c0_24, %c0_25, %c0_26], %25 {strides = array<i32>} : memref<1x1x4x128xf32, #tpu.memory_space<vmem>>, vector<1x1x4x128xf32>,
    return
  }
  func.func @transform_0(%arg0: i32, %arg1: i32, %arg2: i32) -> (i32, i32, i32) {
    %c1_i32 = arith.constant 1 : i32
    %0 = arith.muli %arg1, %c1_i32 : i32
    %1 = arith.addi %0, %arg2 : i32
    %c0_i32 = arith.constant 0 : i32
    %c0_i32_0 = arith.constant 0 : i32
    return %arg0, %c0_i32, %1 : i32, i32, i32
  }
  func.func @transform_1(%arg0: i32, %arg1: i32, %arg2: i32) -> (i32, i32, i32, i32) {
    %c0_i32 = arith.constant 0 : i32
    %c0_i32_0 = arith.constant 0 : i32
    %c0_i32_1 = arith.constant 0 : i32
    return %arg0, %arg1, %c0_i32, %c0_i32_0 : i32, i32, i32, i32
  }
  func.func @transform_2(%arg0: i32, %arg1: i32, %arg2: i32) -> (i32, i32, i32, i32) {
    %c0_i32 = arith.constant 0 : i32
    %c0_i32_0 = arith.constant 0 : i32
    %c0_i32_1 = arith.constant 0 : i32
    return %arg0, %arg1, %c0_i32, %c0_i32_0 : i32, i32, i32, i32
  }
}

</mosaic_0001>

<llo_original>
// kernel: tpu_custom_call.1
$region0: #{tpu_custom_call.1}
  #allocation0 [shape = 'u32[]', space=smem, size = 0x4, offset = 0x4, fixed_abs, tag = 'smem constant byte address 0x4 - core index']
  #allocation1 [shape = 'u32[72,128]{1,0:T(1,128)}', space=vmem, size = 0x9000, scoped, tag = 'internal scratch']
  %s0 = inlined_call_operand.hbm [shape: f32[2,4,256], index: 0, kind: input, shape index: {}]
  %s1 = inlined_call_operand.hbm [shape: f32[2,1,4,4], index: 1, kind: output, shape index: {0}]
  %s2 = inlined_call_operand.hbm [shape: f32[2,1,4,128], index: 2, kind: output, shape index: {1}]
  %3 = xla_tuple %s1, %s2
  %s4 = sld [smem:[#allocation0]]
  $region53: #{tpu_custom_call.1} parent=0
    _
  %s6 = ssub.s32 1, %s4
  %s7 = scalar_select 0, %s6, %s4
  $region1: #{tpu_custom_call.1} parent=0
    #allocation2 [shape = 'u8[8192]{0}', space=vmem, size = 0x2000, scoped, tag = 'input window, operand 0']
    #allocation3 [shape = 's32[2]{0}', space=sflag, size = 0x8, scoped, tag = 'scoped memory for tpu_custom_call.1']
    #allocation4 [shape = 's32[2]{0}', space=sflag, size = 0x8, scoped, tag = 'scoped memory for tpu_custom_call.1']
    #allocation5 [shape = 'u8[4096]{0}', space=vmem, size = 0x1000, scoped, tag = 'output window, operand 0']
    #allocation6 [shape = 'u8[4096]{0}', space=vmem, size = 0x1000, scoped, tag = 'output window, operand 1']
    #allocation7 [shape = 's32[2]{0}', space=sflag, size = 0x8, scoped, tag = 'scoped memory for tpu_custom_call.1']
    %8 = vsyncpa [#allocation3], 0
    %s9 = scalar_lea.sflag [#allocation3], 1
    %10 = vsyncpa %s9, 0
    %11 = vsyncpa [#allocation4], 0
    %s12 = scalar_lea.sflag [#allocation4], 1
    %13 = vsyncpa %s12, 0
    %14 = vsyncpa [#allocation7], 0
    %s15 = scalar_lea.sflag [#allocation7], 1
    %16 = vsyncpa %s15, 0
    loop: start=0, step=1, limit=4
    $region2: #{tpu_custom_call.1} parent=1 // loop_pre_header
      _
    $region3: #{tpu_custom_call.1} parent=1 // loop_header
      %s18 = sphi 0, %s22
      %p19 = scmp.ge.s32.totalorder %s18, 4
      %s25 = sphi 0, %s44
      %s26 = sphi 0, %s40
      %s27 = sphi 0, %s36
      %s28 = sphi 0, %s25
      %s29 = sphi 0, %s26
      %s30 = sphi 0, %s27
      %s31 = sphi 0, %s28
      %s32 = sphi 0, %s29
      %s33 = sphi 0, %s30
      %s51 = sphi 0, %s53
      %s54 = sphi 0, %s51
      %s55 = sphi 0, %s54
      %s71 = sphi 0, %s55
      %s79 = sphi 0, %s81
      %s82 = sphi 0, %s79
      %s83 = sphi 0, %s82
      %s99 = sphi 0, %s83
      %s107 = sphi 0, %s109
      %s110 = sphi 0, %s107
      %s111 = sphi 0, %s110
      %s127 = sphi 0, %s111
    $region4: #{tpu_custom_call.1} parent=1 // loop_header_branch
      %21 = sbr.rel (%p19) target = $region8
    $region5: #{tpu_custom_call.1} parent=1 // loop_body
      %s23 = ssub.s32 %s18, 1
      %s24 = ssub.s32 %s18, 2
      %s34 = sadd.s32 1, %s27
      %p35 = scmp.ge.s32.totalorder %s34, 1
      %s36 = scalar_select %p35, 0, %s34
      %s37 = sadd.s32 1, %s26
      %s38 = scalar_select %p35, %s37, %s26
      %p39 = scmp.ge.s32.totalorder %s38, 1
      %s40 = scalar_select %p39, 0, %s38
      %s41 = sadd.s32 1, %s25
      %s42 = scalar_select %p39, %s41, %s25
      %p43 = scmp.ge.s32.totalorder %s42, 2
      %s44 = scalar_select %p43, 0, %s42
      %s45 = sadd.s32 %s26, %s27
      %s46 = sadd.s32 %s40, %s36
      %s47 = ssub.s32 %s25, %s44
      %s48 = ssub.s32 %s45, %s46
      %s49 = sor.u32 %s47, %s48
      %p50 = scmp.eq.s32.totalorder %s49, 0
      %s52 = sadd.s32 %s51, 1
      %s53 = scalar_select %p50, %s51, %s52
      %p56 = pneg %p50
      %p57 = scmp.eq.s32.totalorder %s18, 1
      %p58 = por %p56, %p57
      %p59 = scmp.ne.s32.totalorder %s51, %s54
      %p60 = scmp.eq.s32.totalorder %s18, 0
      %p61 = por %p59, %p60
      %p62 = scmp.ne.s32.totalorder %s51, %s54
      %p63 = scmp.eq.s32.totalorder %s23, 1
      %p64 = por %p62, %p63
      %p65 = scmp.ne.s32.totalorder %s54, %s55
      %p66 = scmp.eq.s32.totalorder %s23, 0
      %p67 = por %p65, %p66
      %p68 = scmp.ne.s32.totalorder %s54, %s55
      %p69 = scmp.eq.s32.totalorder %s24, 1
      %p70 = por %p68, %p69
      %p72 = scmp.ne.s32.totalorder %s55, %s71
      %p73 = scmp.eq.s32.totalorder %s24, 0
      %p74 = por %p72, %p73
      %s75 = ssub.s32 %s25, %s44
      %s76 = ssub.s32 %s26, %s40
      %s77 = sor.u32 %s75, %s76
      %p78 = scmp.eq.s32.totalorder %s77, 0
      %s80 = sadd.s32 %s79, 1
      %s81 = scalar_select %p78, %s79, %s80
      %p84 = pneg %p78
      %p85 = scmp.eq.s32.totalorder %s18, 1
      %p86 = por %p84, %p85
      %p87 = scmp.ne.s32.totalorder %s79, %s82
      %p88 = scmp.eq.s32.totalorder %s18, 0
      %p89 = por %p87, %p88
      %p90 = scmp.ne.s32.totalorder %s79, %s82
      %p91 = scmp.eq.s32.totalorder %s23, 1
      %p92 = por %p90, %p91
      %p93 = scmp.ne.s32.totalorder %s82, %s83
      %p94 = scmp.eq.s32.totalorder %s23, 0
      %p95 = por %p93, %p94
      %p96 = scmp.ne.s32.totalorder %s82, %s83
      %p97 = scmp.eq.s32.totalorder %s24, 1
      %p98 = por %p96, %p97
      %p100 = scmp.ne.s32.totalorder %s83, %s99
      %p101 = scmp.eq.s32.totalorder %s24, 0
      %p102 = por %p100, %p101
      %s103 = ssub.s32 %s25, %s44
      %s104 = ssub.s32 %s26, %s40
      %s105 = sor.u32 %s103, %s104
      %p106 = scmp.eq.s32.totalorder %s105, 0
      %s108 = sadd.s32 %s107, 1
      %s109 = scalar_select %p106, %s107, %s108
      %p112 = pneg %p106
      %p113 = scmp.eq.s32.totalorder %s18, 1
      %p114 = por %p112, %p113
      %p115 = scmp.ne.s32.totalorder %s107, %s110
      %p116 = scmp.eq.s32.totalorder %s18, 0
      %p117 = por %p115, %p116
      %p118 = scmp.ne.s32.totalorder %s107, %s110
      %p119 = scmp.eq.s32.totalorder %s23, 1
      %p120 = por %p118, %p119
      %p121 = scmp.ne.s32.totalorder %s110, %s111
      %p122 = scmp.eq.s32.totalorder %s23, 0
      %p123 = por %p121, %p122
      %p124 = scmp.ne.s32.totalorder %s110, %s111
      %p125 = scmp.eq.s32.totalorder %s24, 1
      %p126 = por %p124, %p125
      %p128 = scmp.ne.s32.totalorder %s111, %s127
      %p129 = scmp.eq.s32.totalorder %s24, 0
      %p130 = por %p128, %p129
      %p131 = scmp.le.s32.totalorder 1, %s18
      %p132 = scmp.lt.s32.totalorder %s18, 3
      %p133 = pnand %p131, %p132
      %p134 = pneg %p133
      // Predicated region
      $region9: #{tpu_custom_call.1} parent=5 // pred_check
        _
      $region10: #{tpu_custom_call.1} parent=5 // pred_check_branch
        %136 = sbr.rel (%p133) target = $region12
      $region11: #{tpu_custom_call.1} parent=5 // pred_region
        %s137 = ssub.s32 %s18, 1
      $region12: #{tpu_custom_call.1} parent=5 // pred_fallthru
        _
      %p138 = scmp.lt.s32.totalorder %s18, 2
      // Predicated region
      $region13: #{tpu_custom_call.1} parent=5 // pred_check
        %p139 = pneg %p138
      $region14: #{tpu_custom_call.1} parent=5 // pred_check_branch
        %141 = sbr.rel (%p139) target = $region16
      $region15: #{tpu_custom_call.1} parent=5 // pred_region
        // Predicated region
        $region17: #{tpu_custom_call.1} parent=15 // pred_check
          %p142 = pneg %p61
        $region18: #{tpu_custom_call.1} parent=15 // pred_check_branch
          %144 = sbr.rel (%p142) target = $region20
        $region19: #{tpu_custom_call.1} parent=15 // pred_region
          %s145 = sand.u32 %s51, 1
          %s146 = scalar_lea.sflag [#allocation3], %s145
          %s147 = sand.u32 %s51, 1
          %s148 = smul.addr %s147, 8
          %s149 = scalar_lea.vmem [#allocation2], %s148
          %s150 = sadd.s32 %s26, %s27
          %s151 = smul.u32 2, %s150
          %153 = vsyncadd %s146, 0
          %s154 = smul.addr %s25, 2
          %s155 = sadd.s32 %s151, %s154
          %s156 = smul.addr %s155, 4
          %s157 = scalar_lea.hbm %s0, %s156
          %s159 = sshll.u32 %s157, 4
          %s160 = int_to_ptr.hbm [resolvable:$true] %s159
          %s161 = sshll.u32 %s149, 4
          %s162 = int_to_ptr.vmem [resolvable:$true] %s161
          %164 = dma.hbm_to_vmem [thread:$0]  %s160, 128, %s162, %s146
        $region20: #{tpu_custom_call.1} parent=15 // pred_fallthru
          _
      $region16: #{tpu_custom_call.1} parent=5 // pred_fallthru
        _
      %p165 = scmp.le.s32.totalorder 1, %s18
      %p166 = scmp.lt.s32.totalorder %s18, 3
      %p167 = pnand %p165, %p166
      %p168 = pneg %p167
      // Predicated region
      $region21: #{tpu_custom_call.1} parent=5 // pred_check
        _
      $region22: #{tpu_custom_call.1} parent=5 // pred_check_branch
        %170 = sbr.rel (%p167) target = $region24
      $region23: #{tpu_custom_call.1} parent=5 // pred_region
        %s171 = ssub.s32 %s18, 1
        %s172 = sand.u32 %s54, 1
        %s173 = scalar_lea.sflag [#allocation3], %s172
        %s174 = sand.u32 %s54, 1
        %s175 = smul.addr %s174, 8
        %s176 = scalar_lea.vmem [#allocation2], %s175
        // Predicated region
        $region25: #{tpu_custom_call.1} parent=23 // pred_check
          %p177 = pneg %p67
        $region26: #{tpu_custom_call.1} parent=23 // pred_check_branch
          %179 = sbr.rel (%p177) target = $region28
        $region27: #{tpu_custom_call.1} parent=23 // pred_region
          %181 = dma.done %s173, 128
        $region28: #{tpu_custom_call.1} parent=23 // pred_fallthru
          _
        %s182 = sand.u32 %s54, 1
        %s183 = scalar_lea.sflag [#allocation3], %s182
        %s184 = sand.u32 %s54, 1
        %s185 = smul.addr %s184, 8
        %s186 = scalar_lea.vmem [#allocation2], %s185
        %p187 = pneg %p67
        %p188 = pneg %p64
        %p189 = pneg %p95
        %p190 = pneg %p92
        %s191 = sand.u32 %s82, 1
        %s192 = scalar_lea.sflag [#allocation4], %s191
        %s193 = sand.u32 %s82, 1
        %s194 = smul.addr %s193, 4
        %s195 = scalar_lea.vmem [#allocation5], %s194
        %p196 = pneg %p123
        %p197 = pneg %p120
        %s198 = sand.u32 %s110, 1
        %s199 = scalar_lea.sflag [#allocation7], %s198
        %s200 = sand.u32 %s110, 1
        %s201 = smul.addr %s200, 4
        %s202 = scalar_lea.vmem [#allocation6], %s201
        %s203 = sadd.s32 %s29, %s30
        %s204 = smul.u32 2, %s203
        %p205 = scmp.eq.s32.totalorder %s30, 0
        // Predicated region
        $region29: #{tpu_custom_call.1} parent=23 // pred_check
          %p206 = pneg %p205
        $region30: #{tpu_custom_call.1} parent=23 // pred_check_branch
          %208 = sbr.rel (%p206) target = $region32
        $region31: #{tpu_custom_call.1} parent=23 // pred_region
          %vm209 = vcmask 27648
          %210 = vst.msk [vmem:[%s195] sm:$0xf] %vm209, 0.0
          %211 = vst [vmem:[%s202] sm:$0xf] 0.0
        $region32: #{tpu_custom_call.1} parent=23 // pred_fallthru
          _
        %v212 = vld [vmem:[%s176] sm:$0xff]
        %v213 = vld [vmem:[%s195] sm:$0xf]
        %215 = vst [vmem:[#allocation1] ss:$2 sm:$0xff] %v212
        %v216 = vld.sshfl [vmem:[#allocation1] sm:$0xff pattern:$0x75316420]
        %v217 = vld.sshfl [vmem:[#allocation1 + $0x8] sm:$0xff pattern:$0x75316420]
        %220 = vst [vmem:[#allocation1] ss:$2 sm:$0xff] %v212
        %v221 = vld.sshfl [vmem:[#allocation1] sm:$0xff pattern:$0x75316420]
        %v222 = vld.sshfl [vmem:[#allocation1 + $0x8] sm:$0xff pattern:$0x75316420]
        %225 = vmatpush.xpose.msra.mxu0 0.0
        %226 = vmatpush.xpose.msra.mxu0 0.0
        %227 = vmatpush.xpose.msra.mxu0 0.0
        %228 = vmatpush.xpose.msra.mxu0 0.0
        %229 = vmatpush.xpose.msra.mxu0 0.0
        %230 = vmatpush.xpose.msra.mxu0 0.0
        %231 = vmatpush.xpose.msra.mxu0 0.0
        %232 = vmatpush.xpose.msra.mxu0 0.0
        %233 = vmatpush.xpose.msra.mxu0 0.0
        %234 = vmatpush.xpose.msra.mxu0 0.0
        %235 = vmatpush.xpose.msra.mxu0 0.0
        %236 = vmatpush.xpose.msra.mxu0 0.0
        %237 = vmatpush.xpose.msra.mxu0 0.0
        %238 = vmatpush.xpose.msra.mxu0 0.0
        %239 = vmatpush.xpose.msra.mxu0 0.0
        %240 = vmatpush.xpose.msra.mxu0 %v221
        %241 = vmatmul.f32.gmra.mxu0 %v216
        %v242 = vpop.f32.mrf.mxu0
        %v243 = vadd.f32 0.0, %v242
        %244 = vdwg.mxu0
        %245 = vmatpush.xpose.msra.mxu0 0.0
        %246 = vmatpush.xpose.msra.mxu0 0.0
        %247 = vmatpush.xpose.msra.mxu0 0.0
        %248 = vmatpush.xpose.msra.mxu0 0.0
        %249 = vmatpush.xpose.msra.mxu0 0.0
        %250 = vmatpush.xpose.msra.mxu0 0.0
        %251 = vmatpush.xpose.msra.mxu0 0.0
        %252 = vmatpush.xpose.msra.mxu0 0.0
        %253 = vmatpush.xpose.msra.mxu0 0.0
        %254 = vmatpush.xpose.msra.mxu0 0.0
        %255 = vmatpush.xpose.msra.mxu0 0.0
        %256 = vmatpush.xpose.msra.mxu0 0.0
        %257 = vmatpush.xpose.msra.mxu0 0.0
        %258 = vmatpush.xpose.msra.mxu0 0.0
        %259 = vmatpush.xpose.msra.mxu0 0.0
        %260 = vmatpush.xpose.msra.mxu0 %v222
        %261 = vmatmul.f32.gmra.mxu0 %v217
        %v262 = vpop.f32.mrf.mxu0
        %v263 = vadd.f32 %v243, %v262
        %264 = vdwg.mxu0
        %v265 = vadd.f32 %v213, %v263
        %vm266 = vcmask 27648
        %267 = vst.msk [vmem:[%s195] sm:$0xf] %vm266, %v265
        %v268 = vld [vmem:[%s202] sm:$0xf]
        %v269 = vadd.f32 %v268, %v212
        %270 = vst [vmem:[%s202] sm:$0xf] %v269
        %v271 = vld [vmem:[%s202] sm:$0xf]
        %272 = vst [vmem:[#allocation1] ss:$2 sm:$0xff] %v212
        %v273 = vld.sshfl [vmem:[#allocation1 + $0x8] sm:$0xff pattern:$0x75316420]
        %v275 = vadd.f32 %v271, %v273
        %276 = vst [vmem:[%s202] sm:$0xf] %v275
        %s277 = sand.u32 %s82, 1
        %s278 = scalar_lea.sflag [#allocation4], %s277
        %s279 = sand.u32 %s82, 1
        %s280 = smul.addr %s279, 4
        %s281 = scalar_lea.vmem [#allocation5], %s280
        %s282 = sand.u32 %s110, 1
        %s283 = scalar_lea.sflag [#allocation7], %s282
        %s284 = sand.u32 %s110, 1
        %s285 = smul.addr %s284, 4
        %s286 = scalar_lea.vmem [#allocation6], %s285
        // Predicated region
        $region33: #{tpu_custom_call.1} parent=23 // pred_check
          %p287 = pneg %p92
        $region34: #{tpu_custom_call.1} parent=23 // pred_check_branch
          %289 = sbr.rel (%p287) target = $region36
        $region35: #{tpu_custom_call.1} parent=23 // pred_region
          %291 = vsyncadd %s278, 0
          %s292 = sadd.s32 %s29, %s28
          %s293 = smul.addr %s292, 4
          %s294 = scalar_lea.hbm %s1, %s293
          %s296 = sshll.u32 %s281, 4
          %s297 = int_to_ptr.vmem [resolvable:$true] %s296
          %s298 = sshll.u32 %s294, 4
          %s299 = int_to_ptr.hbm [resolvable:$true] %s298
          %301 = dma.vmem_to_hbm [thread:$0]  %s297, 64, %s299, %s278
        $region36: #{tpu_custom_call.1} parent=23 // pred_fallthru
          _
        // Predicated region
        $region37: #{tpu_custom_call.1} parent=23 // pred_check
          %p302 = pneg %p120
        $region38: #{tpu_custom_call.1} parent=23 // pred_check_branch
          %304 = sbr.rel (%p302) target = $region40
        $region39: #{tpu_custom_call.1} parent=23 // pred_region
          %306 = vsyncadd %s283, 0
          %s307 = sadd.s32 %s29, %s28
          %s308 = smul.addr %s307, 4
          %s309 = scalar_lea.hbm %s2, %s308
          %s311 = sshll.u32 %s286, 4
          %s312 = int_to_ptr.vmem [resolvable:$true] %s311
          %s313 = sshll.u32 %s309, 4
          %s314 = int_to_ptr.hbm [resolvable:$true] %s313
          %316 = dma.vmem_to_hbm [thread:$0]  %s312, 64, %s314, %s283
        $region40: #{tpu_custom_call.1} parent=23 // pred_fallthru
          _
      $region24: #{tpu_custom_call.1} parent=5 // pred_fallthru
        _
      %p317 = scmp.le.s32.totalorder 2, %s18
      // Predicated region
      $region41: #{tpu_custom_call.1} parent=5 // pred_check
        %p318 = pneg %p317
      $region42: #{tpu_custom_call.1} parent=5 // pred_check_branch
        %320 = sbr.rel (%p318) target = $region44
      $region43: #{tpu_custom_call.1} parent=5 // pred_region
        %s321 = ssub.s32 %s18, 2
        // Predicated region
        $region45: #{tpu_custom_call.1} parent=43 // pred_check
          %p322 = pneg %p98
        $region46: #{tpu_custom_call.1} parent=43 // pred_check_branch
          %324 = sbr.rel (%p322) target = $region48
        $region47: #{tpu_custom_call.1} parent=43 // pred_region
          %s325 = sand.u32 %s83, 1
          %s326 = scalar_lea.sflag [#allocation4], %s325
          %s327 = sand.u32 %s83, 1
          %s328 = smul.addr %s327, 4
          %s329 = scalar_lea.vmem [#allocation5], %s328
          %331 = dma.done %s326, 64
        $region48: #{tpu_custom_call.1} parent=43 // pred_fallthru
          _
        // Predicated region
        $region49: #{tpu_custom_call.1} parent=43 // pred_check
          %p332 = pneg %p126
        $region50: #{tpu_custom_call.1} parent=43 // pred_check_branch
          %334 = sbr.rel (%p332) target = $region52
        $region51: #{tpu_custom_call.1} parent=43 // pred_region
          %s335 = sand.u32 %s111, 1
          %s336 = scalar_lea.sflag [#allocation7], %s335
          %s337 = sand.u32 %s111, 1
          %s338 = smul.addr %s337, 4
          %s339 = scalar_lea.vmem [#allocation6], %s338
          %341 = dma.done %s336, 64
        $region52: #{tpu_custom_call.1} parent=43 // pred_fallthru
          _
      $region44: #{tpu_custom_call.1} parent=5 // pred_fallthru
        _
    $region6: #{tpu_custom_call.1} parent=1 // loop_footer
      %s22 = sadd.s32 1, %s18
    $region7: #{tpu_custom_call.1} parent=1 // loop_footer_branch
      %17 = sbr.rel target = $region3
    $region8: #{tpu_custom_call.1} parent=1 // loop_exit
      _
    %342 = vsyncpa [#allocation3], 1
    %s343 = scalar_lea.sflag [#allocation3], 1
    %344 = vsyncpa %s343, 1
    %345 = vsyncpa [#allocation4], 1
    %s346 = scalar_lea.sflag [#allocation4], 1
    %347 = vsyncpa %s346, 1
    %348 = vsyncpa [#allocation7], 1
    %s349 = scalar_lea.sflag [#allocation7], 1
    %350 = vsyncpa %s349, 1

</llo_original>
